<compile_context>
chip_gen: v5e
topology: v5e:2x2
jax: 0.10.0
libtpu: 0.0.40
codegen_flags: <defaults>
</compile_context>

<pallas_src>
from functools import partial

import jax
import jax.numpy as jnp
from jax.experimental import pallas as pl
from jax.experimental.pallas import tpu as pltpu


def _lstm_head_kernel(xg_ref,            # (T*B, 4H) f32: per-token pre-projected gates (x@W_ih^T + b)
                      whh_ref,           # (4H, 4H)  bf16: W_hh^T, rows [H:4H) zero
                      h0_ref, c0_ref,    # (B, 4H)   f32: lanes [H:4H) zero
                      fcw_ref,           # (4H, OP)  f32: rows [H:4H) zero, cols [O:OP) zero
                      fcb_ref,           # (1, OP)   f32: cols [O:OP) = -1e9
                      logps_ref,         # (B, OP)
                      hn_ref,            # (B, 4H)
                      cn_ref):           # (B, 4H)
    B, G = h0_ref.shape          # G = 4H = full 128-lane gate width
    H = G // 4
    T = xg_ref.shape[0] // B

    whh = whh_ref[...]           # bf16 recurrent weights, resident across the unrolled loop
    # TODO(synk): on v7x the MRB makes an explicit pltpu.matmul_push_rhs/acc_lhs/pop RHS
    # latch natural; a single bf16 dot per step is the portable choice used here.

    # Loop-invariant per-lane activation constants (hoisted: one build, not T builds).
    #   i/f/o lanes: sigmoid(x) = 0.5*tanh(0.5x)+0.5 ; g lanes: tanh(x)
    lane = jax.lax.broadcasted_iota(jnp.int32, (B, G), 1)
    is_g = (lane >= 2 * H) & (lane < 3 * H)
    pre = jnp.where(is_g, 1.0, 0.5).astype(jnp.float32)
    amp = jnp.where(is_g, 1.0, 0.5).astype(jnp.float32)
    off = jnp.where(is_g, 0.0, 0.5).astype(jnp.float32)

    h = h0_ref[...]
    c = c0_ref[...]

    # Fully unrolled time loop: t is a concrete Python int -> every slice is static.
    # TODO(synk): for T >> 64 switch to lax.fori_loop(..., unroll=4..8) or a grid-axis
    # carry (pl.when init/finalize) to bound code size; at T=8 full unrolling is right.
    for t in range(T):
        xg = xg_ref[pl.ds(t * B, B), :]                                   # static (B, 4H)
        gates = xg + jnp.dot(h.astype(jnp.bfloat16), whh,
                             preferred_element_type=jnp.float32)          # 1 bf16 MXU pass
        acts = amp * jnp.tanh(pre * gates) + off                          # single EUP push: [ i | f | g | o ]
        f_al = pltpu.roll(acts, shift=3 * H, axis=1)                      # f -> lanes [0, H)
        g_al = pltpu.roll(acts, shift=2 * H, axis=1)                      # g -> lanes [0, H)
        o_al = pltpu.roll(acts, shift=H, axis=1)                          # o -> lanes [0, H)
        c = f_al * c + acts * g_al                                        # valid in lanes [0, H)
        h = o_al * jnp.tanh(c)                                            # valid in lanes [0, H)

    # Lane-dense padded outputs; the wrapper slices [:, :H] / [:, :O].
    hn_ref[...] = h
    cn_ref[...] = c

    # fc + log_softmax on lstm_out[-1]; zero rows of fcw kill the padded lanes of h,
    # -1e9 bias on padded output lanes removes them from the softmax sum exactly.
    y = jnp.dot(h, fcw_ref[...], preferred_element_type=jnp.float32) + fcb_ref[...]
    z = y - jnp.max(y, axis=-1, keepdims=True)
    logps_ref[...] = z - jnp.log(jnp.sum(jnp.exp(z), axis=-1, keepdims=True))


def prepare_params(params):
    """One-time parameter prep (kept out of the per-call hot path)."""
    H = params["w_hh_T"].shape[0]
    G = 4 * H
    O = params["fc_w_T"].shape[1]
    OP = ((O + 127) // 128) * 128  # pad fc output to full 128-lane vregs

    # Fold the embedding lookup through the input projection:
    #   x_t @ W_ih^T + b == (embedding @ W_ih^T + b)[token]
    xproj = (jnp.dot(params["embedding"].astype(jnp.float32), params["w_ih_T"],
                     preferred_element_type=jnp.float32) + params["b"])      # (in_size, 4H)

    whh_pad = jnp.pad(params["w_hh_T"], ((0, G - H), (0, 0))).astype(jnp.bfloat16)  # (4H, 4H)
    fcw_pad = jnp.pad(params["fc_w_T"], ((0, G - H), (0, OP - O)))                  # (4H, OP)
    fcb_pad = jnp.pad(params["fc_b"], ((0, 0), (0, OP - O)),
                      constant_values=-1e9)                                         # (1, OP)
    return {"xproj": xproj, "whh_pad": whh_pad, "fcw_pad": fcw_pad, "fcb_pad": fcb_pad}


@partial(jax.jit, static_argnames=("out_size",))
def trade_ai_forward(nn_input, hidden_state, prepped, *, out_size):
    """nn_input: (T, B) int; hidden_state: ((1,B,H),(1,B,H)); returns (logps, (h_n, c_n))."""
    h0, c0 = hidden_state
    T, B = nn_input.shape
    H = h0.shape[-1]
    G = 4 * H
    OP = prepped["fcb_pad"].shape[-1]

    # Token gather outside the kernel (tiny XLA gather): (T*B, 4H) pre-projected inputs.
    ids = nn_input.reshape(-1).astype(jnp.int32)
    xg_all = jnp.take(prepped["xproj"], ids, axis=0)

    # Zero-pad the carries to the full 128-lane gate width (runtime inputs -> hot path).
    h0p = jnp.pad(h0[0].astype(jnp.float32), ((0, 0), (0, G - H)))
    c0p = jnp.pad(c0[0].astype(jnp.float32), ((0, 0), (0, G - H)))

    grid_spec = pl.GridSpec(
        grid=(1,),                      # single invocation; the time loop lives in-kernel
        in_specs=[
            pl.BlockSpec((T * B, G), lambda i: (0, 0)),   # xg table (gathered, pre-projected)
            pl.BlockSpec((G, G), lambda i: (0, 0)),       # W_hh^T (padded, bf16)
            pl.BlockSpec((B, G), lambda i: (0, 0)),       # h0 (padded)
            pl.BlockSpec((B, G), lambda i: (0, 0)),       # c0 (padded)
            pl.BlockSpec((G, OP), lambda i: (0, 0)),      # fc W^T (padded)
            pl.BlockSpec((1, OP), lambda i: (0, 0)),      # fc b (padded with -1e9)
        ],
        out_specs=[
            pl.BlockSpec((B, OP), lambda i: (0, 0)),      # logps (lane-dense, padded)
            pl.BlockSpec((B, G), lambda i: (0, 0)),       # h_n (lane-dense, padded)
            pl.BlockSpec((B, G), lambda i: (0, 0)),       # c_n (lane-dense, padded)
        ],
    )

    logps_pad, hn_pad, cn_pad = pl.pallas_call(
        _lstm_head_kernel,
        out_shape=[
            jax.ShapeDtypeStruct((B, OP), jnp.float32),
            jax.ShapeDtypeStruct((B, G), jnp.float32),
            jax.ShapeDtypeStruct((B, G), jnp.float32),
        ],
        grid_spec=grid_spec,
        compiler_params=pltpu.CompilerParams(
            dimension_semantics=("arbitrary",)),
        # TODO(synk): on v7x, if B grows, add a leading grid axis of size 2 with
        # "parallel" semantics and shard the batch across the two TensorCores.
    )(xg_all, prepped["whh_pad"], h0p, c0p, prepped["fcw_pad"], prepped["fcb_pad"])

    logps = logps_pad[:, :out_size]
    h_n = hn_pad[:, :H][None]
    c_n = cn_pad[:, :H][None]
    return logps, (h_n, c_n)


def _reference_forward(nn_input, hidden_state, params):
    """Pure-JAX f32 reference (lax.scan LSTM) for a correctness check."""
    h0, c0 = hidden_state
    embeds = params["embedding"][nn_input].astype(jnp.float32)
    H = params["w_hh_T"].shape[0]

    def step(carry, x_t):
        h, c = carry
        gates = x_t @ params["w_ih_T"] + h @ params["w_hh_T"] + params["b"]
        i = jax.nn.sigmoid(gates[:, 0:H])
        f = jax.nn.sigmoid(gates[:, H:2 * H])
        g = jnp.tanh(gates[:, 2 * H:3 * H])
        o = jax.nn.sigmoid(gates[:, 3 * H:4 * H])
        c = f * c + i * g
        h = o * jnp.tanh(c)
        return (h, c), h

    (h_n, c_n), hs = jax.lax.scan(step, (h0[0], c0[0]), embeds)
    last = hs[-1]
    y = last @ params["fc_w_T"] + params["fc_b"]
    return jax.nn.log_softmax(y, axis=-1), (h_n[None], c_n[None])


def init_params(key, in_size, embed_size, lstm_size, output_size):
    ks = jax.random.split(key, 6)
    s = 0.1
    return {
        "embedding": s * jax.random.normal(ks[0], (in_size, embed_size), jnp.float32),
        "w_ih_T": s * jax.random.normal(ks[1], (embed_size, 4 * lstm_size), jnp.float32),
        "w_hh_T": s * jax.random.normal(ks[2], (lstm_size, 4 * lstm_size), jnp.float32),
        # combined b_ih + b_hh, kept (1, 4H)
        "b": s * jax.random.normal(ks[3], (1, 4 * lstm_size), jnp.float32),
        "fc_w_T": s * jax.random.normal(ks[4], (lstm_size, output_size), jnp.float32),
        "fc_b": s * jax.random.normal(ks[5], (1, output_size), jnp.float32),
    }


if __name__ == "__main__":
    # small shapes consistent with the module
    in_size, embed_size, lstm_size, output_size = 16, 32, 32, 8
    seq_len, batch = 8, 2

    key = jax.random.PRNGKey(0)
    kp, kx = jax.random.split(key)
    params = init_params(kp, in_size, embed_size, lstm_size, output_size)
    prepped = prepare_params(params)          # one-time param prep (outside the hot path)

    nn_input = jax.random.randint(kx, (seq_len, batch), 0, in_size, dtype=jnp.int32)
    hidden_state = (jnp.zeros((1, batch, lstm_size), jnp.float32),
                    jnp.zeros((1, batch, lstm_size), jnp.float32))

    logps, (h_n, c_n) = trade_ai_forward(nn_input, hidden_state, prepped,
                                         out_size=output_size)
    jax.block_until_ready((logps, h_n, c_n))

    # numerical sanity check against a pure-JAX f32 reference
    # (tolerance loosened vs. f32-only kernel: the recurrent matmul runs in bf16)
    ref_logps, (ref_h, ref_c) = _reference_forward(nn_input, hidden_state, params)
    assert logps.shape == ref_logps.shape and h_n.shape == ref_h.shape
    assert jnp.allclose(logps, ref_logps, atol=1e-2), "logps mismatch"
    assert jnp.allclose(h_n, ref_h, atol=1e-2), "h_n mismatch"
    assert jnp.allclose(c_n, ref_c, atol=1e-2), "c_n mismatch"

    # TODO(synk): dropout is treated as inference-mode identity (no PRNG mask applied).
    print("KERNEL_OK")
</pallas_src>

<mosaic_0001>
module attributes {stable_mosaic.version = 11 : i64} {
  func.func @_lstm_head_kernel(%arg0: i32, %arg1: memref<16x128xf32, #tpu.memory_space<vmem>>, %arg2: memref<128x128xbf16, #tpu.memory_space<vmem>>, %arg3: memref<2x128xf32, #tpu.memory_space<vmem>>, %arg4: memref<2x128xf32, #tpu.memory_space<vmem>>, %arg5: memref<128x128xf32, #tpu.memory_space<vmem>>, %arg6: memref<1x128xf32, #tpu.memory_space<vmem>>, %arg7: memref<2x128xf32, #tpu.memory_space<vmem>>, %arg8: memref<2x128xf32, #tpu.memory_space<vmem>>, %arg9: memref<2x128xf32, #tpu.memory_space<vmem>>) attributes {dimension_semantics = [#tpu.dimension_semantics<arbitrary>], iteration_bounds = array<i64: 1>, scalar_prefetch = 0 : i64, scratch_operands = 0 : i64, tpu.core_type = #tpu.core_type<tc>, window_params = [{pipeline_mode = #tpu.pipeline_mode<synchronous>, transform_indices = @transform_0, window_bounds = array<i64: 16, 128>}, {pipeline_mode = #tpu.pipeline_mode<synchronous>, transform_indices = @transform_1, window_bounds = array<i64: 128, 128>}, {pipeline_mode = #tpu.pipeline_mode<synchronous>, transform_indices = @transform_2, window_bounds = array<i64: 2, 128>}, {pipeline_mode = #tpu.pipeline_mode<synchronous>, transform_indices = @transform_3, window_bounds = array<i64: 2, 128>}, {pipeline_mode = #tpu.pipeline_mode<synchronous>, transform_indices = @transform_4, window_bounds = array<i64: 128, 128>}, {pipeline_mode = #tpu.pipeline_mode<synchronous>, transform_indices = @transform_5, window_bounds = array<i64: 1, 128>}, {pipeline_mode = #tpu.pipeline_mode<synchronous>, transform_indices = @transform_6, window_bounds = array<i64: 2, 128>}, {pipeline_mode = #tpu.pipeline_mode<synchronous>, transform_indices = @transform_7, window_bounds = array<i64: 2, 128>}, {pipeline_mode = #tpu.pipeline_mode<synchronous>, transform_indices = @transform_8, window_bounds = array<i64: 2, 128>}]} {
    %c0 = arith.constant 0 : index
    %c0_0 = arith.constant 0 : index
    %0 = vector.load %arg2[%c0, %c0_0] : memref<128x128xbf16, #tpu.memory_space<vmem>>, vector<128x128xbf16>
    %1 = tpu.iota {dimensions = array<i32: 1>} : vector<2x128xi32>
    %c64_i32 = arith.constant 64 : i32
    %2 = vector.broadcast %c64_i32 : i32 to vector<2x128xi32>
    %3 = arith.cmpi sge, %1, %2 : vector<2x128xi32>
    %c96_i32 = arith.constant 96 : i32
    %4 = vector.broadcast %c96_i32 : i32 to vector<2x128xi32>
    %5 = arith.cmpi slt, %1, %4 : vector<2x128xi32>
    %6 = arith.andi %3, %5 : vector<2x128xi1>
    %cst = arith.constant 1.000000e+00 : f32
    %cst_1 = arith.constant 5.000000e-01 : f32
    %7 = vector.broadcast %cst : f32 to vector<2x128xf32>
    %8 = vector.broadcast %cst_1 : f32 to vector<2x128xf32>
    %9 = arith.select %6, %7, %8 : vector<2x128xi1>, vector<2x128xf32>
    %cst_2 = arith.constant 1.000000e+00 : f32
    %cst_3 = arith.constant 5.000000e-01 : f32
    %10 = vector.broadcast %cst_2 : f32 to vector<2x128xf32>
    %11 = vector.broadcast %cst_3 : f32 to vector<2x128xf32>
    %12 = arith.select %6, %10, %11 : vector<2x128xi1>, vector<2x128xf32>
    %cst_4 = arith.constant 0.000000e+00 : f32
    %cst_5 = arith.constant 5.000000e-01 : f32
    %13 = vector.broadcast %cst_4 : f32 to vector<2x128xf32>
    %14 = vector.broadcast %cst_5 : f32 to vector<2x128xf32>
    %15 = arith.select %6, %13, %14 : vector<2x128xi1>, vector<2x128xf32>
    %c0_6 = arith.constant 0 : index
    %c0_7 = arith.constant 0 : index
    %16 = vector.load %arg3[%c0_6, %c0_7] : memref<2x128xf32, #tpu.memory_space<vmem>>, vector<2x128xf32>
    %c0_8 = arith.constant 0 : index
    %c0_9 = arith.constant 0 : index
    %17 = vector.load %arg4[%c0_8, %c0_9] : memref<2x128xf32, #tpu.memory_space<vmem>>, vector<2x128xf32>
    %c0_10 = arith.constant 0 : index
    %c0_11 = arith.constant 0 : index
    %18 = vector.load %arg1[%c0_10, %c0_11] : memref<16x128xf32, #tpu.memory_space<vmem>>, vector<2x128xf32>
    %19 = arith.truncf %16 : vector<2x128xf32> to vector<2x128xbf16>
    %cst_12 = arith.constant dense<0.000000e+00> : vector<2x128xf32>
    %20 = tpu.matmul %19, %0, %cst_12 {dimension_numbers = #tpu.dot_dimension_numbers<[1], [0], [0], [1], [0, 0, 1, 1], [], []>} : vector<2x128xbf16>, vector<128x128xbf16>, vector<2x128xf32> -> vector<2x128xf32>
    %21 = arith.addf %18, %20 : vector<2x128xf32>
    %22 = arith.mulf %9, %21 : vector<2x128xf32>
    %23 = math.tanh %22 : vector<2x128xf32>
    %24 = arith.mulf %12, %23 : vector<2x128xf32>
    %25 = arith.addf %24, %15 : vector<2x128xf32>
    %c96_i32_13 = arith.constant 96 : i32
    %26 = tpu.dynamic_rotate %25 by %c96_i32_13 dim 1 : vector<2x128xf32>, i32 -> vector<2x128xf32>
    %c64_i32_14 = arith.constant 64 : i32
    %27 = tpu.dynamic_rotate %25 by %c64_i32_14 dim 1 : vector<2x128xf32>, i32 -> vector<2x128xf32>
    %c32_i32 = arith.constant 32 : i32
    %28 = tpu.dynamic_rotate %25 by %c32_i32 dim 1 : vector<2x128xf32>, i32 -> vector<2x128xf32>
    %29 = arith.mulf %26, %17 : vector<2x128xf32>
    %30 = arith.mulf %25, %27 : vector<2x128xf32>
    %31 = arith.addf %29, %30 : vector<2x128xf32>
    %32 = math.tanh %31 : vector<2x128xf32>
    %33 = arith.mulf %28, %32 : vector<2x128xf32>
    %c2 = arith.constant 2 : index
    %c0_15 = arith.constant 0 : index
    %34 = vector.load %arg1[%c2, %c0_15] : memref<16x128xf32, #tpu.memory_space<vmem>>, vector<2x128xf32>
    %35 = arith.truncf %33 : vector<2x128xf32> to vector<2x128xbf16>
    %cst_16 = arith.constant dense<0.000000e+00> : vector<2x128xf32>
    %36 = tpu.matmul %35, %0, %cst_16 {dimension_numbers = #tpu.dot_dimension_numbers<[1], [0], [0], [1], [0, 0, 1, 1], [], []>} : vector<2x128xbf16>, vector<128x128xbf16>, vector<2x128xf32> -> vector<2x128xf32>
    %37 = arith.addf %34, %36 : vector<2x128xf32>
    %38 = arith.mulf %9, %37 : vector<2x128xf32>
    %39 = math.tanh %38 : vector<2x128xf32>
    %40 = arith.mulf %12, %39 : vector<2x128xf32>
    %41 = arith.addf %40, %15 : vector<2x128xf32>
    %c96_i32_17 = arith.constant 96 : i32
    %42 = tpu.dynamic_rotate %41 by %c96_i32_17 dim 1 : vector<2x128xf32>, i32 -> vector<2x128xf32>
    %c64_i32_18 = arith.constant 64 : i32
    %43 = tpu.dynamic_rotate %41 by %c64_i32_18 dim 1 : vector<2x128xf32>, i32 -> vector<2x128xf32>
    %c32_i32_19 = arith.constant 32 : i32
    %44 = tpu.dynamic_rotate %41 by %c32_i32_19 dim 1 : vector<2x128xf32>, i32 -> vector<2x128xf32>
    %45 = arith.mulf %42, %31 : vector<2x128xf32>
    %46 = arith.mulf %41, %43 : vector<2x128xf32>
    %47 = arith.addf %45, %46 : vector<2x128xf32>
    %48 = math.tanh %47 : vector<2x128xf32>
    %49 = arith.mulf %44, %48 : vector<2x128xf32>
    %c4 = arith.constant 4 : index
    %c0_20 = arith.constant 0 : index
    %50 = vector.load %arg1[%c4, %c0_20] : memref<16x128xf32, #tpu.memory_space<vmem>>, vector<2x128xf32>
    %51 = arith.truncf %49 : vector<2x128xf32> to vector<2x128xbf16>
    %cst_21 = arith.constant dense<0.000000e+00> : vector<2x128xf32>
    %52 = tpu.matmul %51, %0, %cst_21 {dimension_numbers = #tpu.dot_dimension_numbers<[1], [0], [0], [1], [0, 0, 1, 1], [], []>} : vector<2x128xbf16>, vector<128x128xbf16>, vector<2x128xf32> -> vector<2x128xf32>
    %53 = arith.addf %50, %52 : vector<2x128xf32>
    %54 = arith.mulf %9, %53 : vector<2x128xf32>
    %55 = math.tanh %54 : vector<2x128xf32>
    %56 = arith.mulf %12, %55 : vector<2x128xf32>
    %57 = arith.addf %56, %15 : vector<2x128xf32>
    %c96_i32_22 = arith.constant 96 : i32
    %58 = tpu.dynamic_rotate %57 by %c96_i32_22 dim 1 : vector<2x128xf32>, i32 -> vector<2x128xf32>
    %c64_i32_23 = arith.constant 64 : i32
    %59 = tpu.dynamic_rotate %57 by %c64_i32_23 dim 1 : vector<2x128xf32>, i32 -> vector<2x128xf32>
    %c32_i32_24 = arith.constant 32 : i32
    %60 = tpu.dynamic_rotate %57 by %c32_i32_24 dim 1 : vector<2x128xf32>, i32 -> vector<2x128xf32>
    %61 = arith.mulf %58, %47 : vector<2x128xf32>
    %62 = arith.mulf %57, %59 : vector<2x128xf32>
    %63 = arith.addf %61, %62 : vector<2x128xf32>
    %64 = math.tanh %63 : vector<2x128xf32>
    %65 = arith.mulf %60, %64 : vector<2x128xf32>
    %c6 = arith.constant 6 : index
    %c0_25 = arith.constant 0 : index
    %66 = vector.load %arg1[%c6, %c0_25] : memref<16x128xf32, #tpu.memory_space<vmem>>, vector<2x128xf32>
    %67 = arith.truncf %65 : vector<2x128xf32> to vector<2x128xbf16>
    %cst_26 = arith.constant dense<0.000000e+00> : vector<2x128xf32>
    %68 = tpu.matmul %67, %0, %cst_26 {dimension_numbers = #tpu.dot_dimension_numbers<[1], [0], [0], [1], [0, 0, 1, 1], [], []>} : vector<2x128xbf16>, vector<128x128xbf16>, vector<2x128xf32> -> vector<2x128xf32>
    %69 = arith.addf %66, %68 : vector<2x128xf32>
    %70 = arith.mulf %9, %69 : vector<2x128xf32>
    %71 = math.tanh %70 : vector<2x128xf32>
    %72 = arith.mulf %12, %71 : vector<2x128xf32>
    %73 = arith.addf %72, %15 : vector<2x128xf32>
    %c96_i32_27 = arith.constant 96 : i32
    %74 = tpu.dynamic_rotate %73 by %c96_i32_27 dim 1 : vector<2x128xf32>, i32 -> vector<2x128xf32>
    %c64_i32_28 = arith.constant 64 : i32
    %75 = tpu.dynamic_rotate %73 by %c64_i32_28 dim 1 : vector<2x128xf32>, i32 -> vector<2x128xf32>
    %c32_i32_29 = arith.constant 32 : i32
    %76 = tpu.dynamic_rotate %73 by %c32_i32_29 dim 1 : vector<2x128xf32>, i32 -> vector<2x128xf32>
    %77 = arith.mulf %74, %63 : vector<2x128xf32>
    %78 = arith.mulf %73, %75 : vector<2x128xf32>
    %79 = arith.addf %77, %78 : vector<2x128xf32>
    %80 = math.tanh %79 : vector<2x128xf32>
    %81 = arith.mulf %76, %80 : vector<2x128xf32>
    %c8 = arith.constant 8 : index
    %c0_30 = arith.constant 0 : index
    %82 = vector.load %arg1[%c8, %c0_30] : memref<16x128xf32, #tpu.memory_space<vmem>>, vector<2x128xf32>
    %83 = arith.truncf %81 : vector<2x128xf32> to vector<2x128xbf16>
    %cst_31 = arith.constant dense<0.000000e+00> : vector<2x128xf32>
    %84 = tpu.matmul %83, %0, %cst_31 {dimension_numbers = #tpu.dot_dimension_numbers<[1], [0], [0], [1], [0, 0, 1, 1], [], []>} : vector<2x128xbf16>, vector<128x128xbf16>, vector<2x128xf32> -> vector<2x128xf32>
    %85 = arith.addf %82, %84 : vector<2x128xf32>
    %86 = arith.mulf %9, %85 : vector<2x128xf32>
    %87 = math.tanh %86 : vector<2x128xf32>
    %88 = arith.mulf %12, %87 : vector<2x128xf32>
    %89 = arith.addf %88, %15 : vector<2x128xf32>
    %c96_i32_32 = arith.constant 96 : i32
    %90 = tpu.dynamic_rotate %89 by %c96_i32_32 dim 1 : vector<2x128xf32>, i32 -> vector<2x128xf32>
    %c64_i32_33 = arith.constant 64 : i32
    %91 = tpu.dynamic_rotate %89 by %c64_i32_33 dim 1 : vector<2x128xf32>, i32 -> vector<2x128xf32>
    %c32_i32_34 = arith.constant 32 : i32
    %92 = tpu.dynamic_rotate %89 by %c32_i32_34 dim 1 : vector<2x128xf32>, i32 -> vector<2x128xf32>
    %93 = arith.mulf %90, %79 : vector<2x128xf32>
    %94 = arith.mulf %89, %91 : vector<2x128xf32>
    %95 = arith.addf %93, %94 : vector<2x128xf32>
    %96 = math.tanh %95 : vector<2x128xf32>
    %97 = arith.mulf %92, %96 : vector<2x128xf32>
    %c10 = arith.constant 10 : index
    %c0_35 = arith.constant 0 : index
    %98 = vector.load %arg1[%c10, %c0_35] : memref<16x128xf32, #tpu.memory_space<vmem>>, vector<2x128xf32>
    %99 = arith.truncf %97 : vector<2x128xf32> to vector<2x128xbf16>
    %cst_36 = arith.constant dense<0.000000e+00> : vector<2x128xf32>
    %100 = tpu.matmul %99, %0, %cst_36 {dimension_numbers = #tpu.dot_dimension_numbers<[1], [0], [0], [1], [0, 0, 1, 1], [], []>} : vector<2x128xbf16>, vector<128x128xbf16>, vector<2x128xf32> -> vector<2x128xf32>
    %101 = arith.addf %98, %100 : vector<2x128xf32>
    %102 = arith.mulf %9, %101 : vector<2x128xf32>
    %103 = math.tanh %102 : vector<2x128xf32>
    %104 = arith.mulf %12, %103 : vector<2x128xf32>
    %105 = arith.addf %104, %15 : vector<2x128xf32>
    %c96_i32_37 = arith.constant 96 : i32
    %106 = tpu.dynamic_rotate %105 by %c96_i32_37 dim 1 : vector<2x128xf32>, i32 -> vector<2x128xf32>
    %c64_i32_38 = arith.constant 64 : i32
    %107 = tpu.dynamic_rotate %105 by %c64_i32_38 dim 1 : vector<2x128xf32>, i32 -> vector<2x128xf32>
    %c32_i32_39 = arith.constant 32 : i32
    %108 = tpu.dynamic_rotate %105 by %c32_i32_39 dim 1 : vector<2x128xf32>, i32 -> vector<2x128xf32>
    %109 = arith.mulf %106, %95 : vector<2x128xf32>
    %110 = arith.mulf %105, %107 : vector<2x128xf32>
    %111 = arith.addf %109, %110 : vector<2x128xf32>
    %112 = math.tanh %111 : vector<2x128xf32>
    %113 = arith.mulf %108, %112 : vector<2x128xf32>
    %c12 = arith.constant 12 : index
    %c0_40 = arith.constant 0 : index
    %114 = vector.load %arg1[%c12, %c0_40] : memref<16x128xf32, #tpu.memory_space<vmem>>, vector<2x128xf32>
    %115 = arith.truncf %113 : vector<2x128xf32> to vector<2x128xbf16>
    %cst_41 = arith.constant dense<0.000000e+00> : vector<2x128xf32>
    %116 = tpu.matmul %115, %0, %cst_41 {dimension_numbers = #tpu.dot_dimension_numbers<[1], [0], [0], [1], [0, 0, 1, 1], [], []>} : vector<2x128xbf16>, vector<128x128xbf16>, vector<2x128xf32> -> vector<2x128xf32>
    %117 = arith.addf %114, %116 : vector<2x128xf32>
    %118 = arith.mulf %9, %117 : vector<2x128xf32>
    %119 = math.tanh %118 : vector<2x128xf32>
    %120 = arith.mulf %12, %119 : vector<2x128xf32>
    %121 = arith.addf %120, %15 : vector<2x128xf32>
    %c96_i32_42 = arith.constant 96 : i32
    %122 = tpu.dynamic_rotate %121 by %c96_i32_42 dim 1 : vector<2x128xf32>, i32 -> vector<2x128xf32>
    %c64_i32_43 = arith.constant 64 : i32
    %123 = tpu.dynamic_rotate %121 by %c64_i32_43 dim 1 : vector<2x128xf32>, i32 -> vector<2x128xf32>
    %c32_i32_44 = arith.constant 32 : i32
    %124 = tpu.dynamic_rotate %121 by %c32_i32_44 dim 1 : vector<2x128xf32>, i32 -> vector<2x128xf32>
    %125 = arith.mulf %122, %111 : vector<2x128xf32>
    %126 = arith.mulf %121, %123 : vector<2x128xf32>
    %127 = arith.addf %125, %126 : vector<2x128xf32>
    %128 = math.tanh %127 : vector<2x128xf32>
    %129 = arith.mulf %124, %128 : vector<2x128xf32>
    %c14 = arith.constant 14 : index
    %c0_45 = arith.constant 0 : index
    %130 = vector.load %arg1[%c14, %c0_45] : memref<16x128xf32, #tpu.memory_space<vmem>>, vector<2x128xf32>
    %131 = arith.truncf %129 : vector<2x128xf32> to vector<2x128xbf16>
    %cst_46 = arith.constant dense<0.000000e+00> : vector<2x128xf32>
    %132 = tpu.matmul %131, %0, %cst_46 {dimension_numbers = #tpu.dot_dimension_numbers<[1], [0], [0], [1], [0, 0, 1, 1], [], []>} : vector<2x128xbf16>, vector<128x128xbf16>, vector<2x128xf32> -> vector<2x128xf32>
    %133 = arith.addf %130, %132 : vector<2x128xf32>
    %134 = arith.mulf %9, %133 : vector<2x128xf32>
    %135 = math.tanh %134 : vector<2x128xf32>
    %136 = arith.mulf %12, %135 : vector<2x128xf32>
    %137 = arith.addf %136, %15 : vector<2x128xf32>
    %c96_i32_47 = arith.constant 96 : i32
    %138 = tpu.dynamic_rotate %137 by %c96_i32_47 dim 1 : vector<2x128xf32>, i32 -> vector<2x128xf32>
    %c64_i32_48 = arith.constant 64 : i32
    %139 = tpu.dynamic_rotate %137 by %c64_i32_48 dim 1 : vector<2x128xf32>, i32 -> vector<2x128xf32>
    %c32_i32_49 = arith.constant 32 : i32
    %140 = tpu.dynamic_rotate %137 by %c32_i32_49 dim 1 : vector<2x128xf32>, i32 -> vector<2x128xf32>
    %141 = arith.mulf %138, %127 : vector<2x128xf32>
    %142 = arith.mulf %137, %139 : vector<2x128xf32>
    %143 = arith.addf %141, %142 : vector<2x128xf32>
    %144 = math.tanh %143 : vector<2x128xf32>
    %145 = arith.mulf %140, %144 : vector<2x128xf32>
    %c0_50 = arith.constant 0 : index
    %c0_51 = arith.constant 0 : index
    %146 = vector.load %arg8[%c0_50, %c0_51] : memref<2x128xf32, #tpu.memory_space<vmem>>, vector<2x128xf32>
    tpu.vector_store %arg8[%c0_50, %c0_51], %145 {strides = array<i32>} : memref<2x128xf32, #tpu.memory_space<vmem>>, vector<2x128xf32>,
    %c0_52 = arith.constant 0 : index
    %c0_53 = arith.constant 0 : index
    %147 = vector.load %arg9[%c0_52, %c0_53] : memref<2x128xf32, #tpu.memory_space<vmem>>, vector<2x128xf32>
    tpu.vector_store %arg9[%c0_52, %c0_53], %143 {strides = array<i32>} : memref<2x128xf32, #tpu.memory_space<vmem>>, vector<2x128xf32>,
    %c0_54 = arith.constant 0 : index
    %c0_55 = arith.constant 0 : index
    %148 = vector.load %arg5[%c0_54, %c0_55] : memref<128x128xf32, #tpu.memory_space<vmem>>, vector<128x128xf32>
    %cst_56 = arith.constant dense<0.000000e+00> : vector<2x128xf32>
    %149 = tpu.matmul %145, %148, %cst_56 {dimension_numbers = #tpu.dot_dimension_numbers<[1], [0], [0], [1], [0, 0, 1, 1], [], []>} : vector<2x128xf32>, vector<128x128xf32>, vector<2x128xf32> -> vector<2x128xf32>
    %c0_57 = arith.constant 0 : index
    %c0_58 = arith.constant 0 : index
    %150 = vector.load %arg6[%c0_57, %c0_58] : memref<1x128xf32, #tpu.memory_space<vmem>>, vector<1x128xf32>
    %151 = vector.broadcast %150 : vector<1x128xf32> to vector<2x128xf32>
    %152 = arith.addf %149, %151 : vector<2x128xf32>
    %cst_59 = arith.constant dense<0xFF800000> : vector<2xf32>
    %153 = vector.multi_reduction <maximumf>, %152, %cst_59 [1] : vector<2x128xf32> to vector<2xf32>
    %154 = vector.shape_cast %153 : vector<2xf32> to vector<2x1xf32>
    %155 = vector.broadcast %154 : vector<2x1xf32> to vector<2x128xf32>
    %156 = arith.subf %152, %155 : vector<2x128xf32>
    %157 = math.exp %156 : vector<2x128xf32>
    %cst_60 = arith.constant dense<0.000000e+00> : vector<2xf32>
    %158 = vector.multi_reduction <add>, %157, %cst_60 [1] : vector<2x128xf32> to vector<2xf32>
    %159 = vector.shape_cast %158 : vector<2xf32> to vector<2x1xf32>
    %160 = math.log %159 : vector<2x1xf32>
    %161 = vector.broadcast %160 : vector<2x1xf32> to vector<2x128xf32>
    %162 = arith.subf %156, %161 : vector<2x128xf32>
    %c0_61 = arith.constant 0 : index
    %c0_62 = arith.constant 0 : index
    %163 = vector.load %arg7[%c0_61, %c0_62] : memref<2x128xf32, #tpu.memory_space<vmem>>, vector<2x128xf32>
    tpu.vector_store %arg7[%c0_61, %c0_62], %162 {strides = array<i32>} : memref<2x128xf32, #tpu.memory_space<vmem>>, vector<2x128xf32>,
    return
  }
  func.func @transform_0(%arg0: i32) -> (i32, i32) {
    %c0_i32 = arith.constant 0 : i32
    %c0_i32_0 = arith.constant 0 : i32
    %c0_i32_1 = arith.constant 0 : i32
    return %c0_i32, %c0_i32_0 : i32, i32
  }
  func.func @transform_1(%arg0: i32) -> (i32, i32) {
    %c0_i32 = arith.constant 0 : i32
    %c0_i32_0 = arith.constant 0 : i32
    %c0_i32_1 = arith.constant 0 : i32
    return %c0_i32, %c0_i32_0 : i32, i32
  }
  func.func @transform_2(%arg0: i32) -> (i32, i32) {
    %c0_i32 = arith.constant 0 : i32
    %c0_i32_0 = arith.constant 0 : i32
    %c0_i32_1 = arith.constant 0 : i32
    return %c0_i32, %c0_i32_0 : i32, i32
  }
  func.func @transform_3(%arg0: i32) -> (i32, i32) {
    %c0_i32 = arith.constant 0 : i32
    %c0_i32_0 = arith.constant 0 : i32
    %c0_i32_1 = arith.constant 0 : i32
    return %c0_i32, %c0_i32_0 : i32, i32
  }
  func.func @transform_4(%arg0: i32) -> (i32, i32) {
    %c0_i32 = arith.constant 0 : i32
    %c0_i32_0 = arith.constant 0 : i32
    %c0_i32_1 = arith.constant 0 : i32
    return %c0_i32, %c0_i32_0 : i32, i32
  }
  func.func @transform_5(%arg0: i32) -> (i32, i32) {
    %c0_i32 = arith.constant 0 : i32
    %c0_i32_0 = arith.constant 0 : i32
    %c0_i32_1 = arith.constant 0 : i32
    return %c0_i32, %c0_i32_0 : i32, i32
  }
  func.func @transform_6(%arg0: i32) -> (i32, i32) {
    %c0_i32 = arith.constant 0 : i32
    %c0_i32_0 = arith.constant 0 : i32
    %c0_i32_1 = arith.constant 0 : i32
    return %c0_i32, %c0_i32_0 : i32, i32
  }
  func.func @transform_7(%arg0: i32) -> (i32, i32) {
    %c0_i32 = arith.constant 0 : i32
    %c0_i32_0 = arith.constant 0 : i32
    %c0_i32_1 = arith.constant 0 : i32
    return %c0_i32, %c0_i32_0 : i32, i32
  }
  func.func @transform_8(%arg0: i32) -> (i32, i32) {
    %c0_i32 = arith.constant 0 : i32
    %c0_i32_0 = arith.constant 0 : i32
    %c0_i32_1 = arith.constant 0 : i32
    return %c0_i32, %c0_i32_0 : i32, i32
  }
}

</mosaic_0001>

<llo_original>
// kernel: trade_ai_forward.1
$region0: #{trade_ai_forward.1}
  #allocation0 [shape = 'u32[]', space=smem, size = 0x4, offset = 0x4, fixed_abs, tag = 'smem constant byte address 0x4 - core index']
  #allocation1 [shape = 'u32[72,128]{1,0:T(1,128)}', space=vmem, size = 0x9000, scoped, tag = 'internal scratch']
  %s0 = inlined_call_operand.vmem [shape: f32[16,128], index: 0, kind: input, shape index: {}]
  %s1 = inlined_call_operand.vmem [shape: bf16[128,128], index: 1, kind: input, shape index: {}]
  %s2 = inlined_call_operand.vmem [shape: f32[2,128], index: 2, kind: input, shape index: {}]
  %s3 = inlined_call_operand.vmem [shape: f32[2,128], index: 3, kind: input, shape index: {}]
  %s4 = inlined_call_operand.vmem [shape: f32[128,128], index: 4, kind: input, shape index: {}]
  %s5 = inlined_call_operand.vmem [shape: f32[1,128], index: 5, kind: input, shape index: {}]
  %s6 = inlined_call_operand.hbm [shape: f32[2,128], index: 6, kind: output, shape index: {0}]
  %s7 = inlined_call_operand.vmem [shape: f32[2,128], index: 7, kind: output, shape index: {1}]
  %s8 = inlined_call_operand.vmem [shape: f32[2,128], index: 8, kind: output, shape index: {2}]
  %9 = xla_tuple %s6, %s7, %s8
  %s10 = sld [smem:[#allocation0]]
  $region50: #{trade_ai_forward.1} parent=0
    _
  %s12 = ssub.s32 1, %s10
  %s13 = scalar_select 0, %s12, %s10
  $region1: #{trade_ai_forward.1} parent=0
    #allocation2 [shape = 'u8[1024]{0}', space=vmem, size = 0x400, scoped, tag = 'output window, operand 0, single buffered']
    #allocation3 [shape = 's32[1]{0}', space=sflag, size = 0x4, scoped, tag = 'scoped memory for trade_ai_forward.1']
    %14 = vsyncpa [#allocation3], 0
    // Predicated region
    $region2: #{trade_ai_forward.1} parent=1 // pred_check
      _
    $region3: #{trade_ai_forward.1} parent=1 // pred_check_branch
      %16 = sbr.rel (0) target = $region5
    $region4: #{trade_ai_forward.1} parent=1 // pred_region
      _
    $region5: #{trade_ai_forward.1} parent=1 // pred_fallthru
      _
    // Predicated region
    $region6: #{trade_ai_forward.1} parent=1 // pred_check
      _
    $region7: #{trade_ai_forward.1} parent=1 // pred_check_branch
      %18 = sbr.rel (0) target = $region9
    $region8: #{trade_ai_forward.1} parent=1 // pred_region
      _
    $region9: #{trade_ai_forward.1} parent=1 // pred_fallthru
      _
    // Predicated region
    $region10: #{trade_ai_forward.1} parent=1 // pred_check
      _
    $region11: #{trade_ai_forward.1} parent=1 // pred_check_branch
      %20 = sbr.rel (0) target = $region13
    $region12: #{trade_ai_forward.1} parent=1 // pred_region
      _
    $region13: #{trade_ai_forward.1} parent=1 // pred_fallthru
      _
    // Predicated region
    $region14: #{trade_ai_forward.1} parent=1 // pred_check
      _
    $region15: #{trade_ai_forward.1} parent=1 // pred_check_branch
      %22 = sbr.rel (0) target = $region17
    $region16: #{trade_ai_forward.1} parent=1 // pred_region
      _
    $region17: #{trade_ai_forward.1} parent=1 // pred_fallthru
      _
    // Predicated region
    $region18: #{trade_ai_forward.1} parent=1 // pred_check
      _
    $region19: #{trade_ai_forward.1} parent=1 // pred_check_branch
      %24 = sbr.rel (0) target = $region21
    $region20: #{trade_ai_forward.1} parent=1 // pred_region
      _
    $region21: #{trade_ai_forward.1} parent=1 // pred_fallthru
      _
    // Predicated region
    $region22: #{trade_ai_forward.1} parent=1 // pred_check
      _
    $region23: #{trade_ai_forward.1} parent=1 // pred_check_branch
      %26 = sbr.rel (0) target = $region25
    $region24: #{trade_ai_forward.1} parent=1 // pred_region
      _
    $region25: #{trade_ai_forward.1} parent=1 // pred_fallthru
      _
    %v27 = vld [vmem:[%s1] sm:$0xf]
    %v28 = vld [vmem:[%s1 + $0x4] sm:$0xf]
    %v29 = vld [vmem:[%s1 + $0x8] sm:$0xf]
    %v30 = vld [vmem:[%s1 + $0xc] sm:$0xf]
    %v31 = vld [vmem:[%s1 + $0x10] sm:$0xf]
    %v32 = vld [vmem:[%s1 + $0x14] sm:$0xf]
    %v33 = vld [vmem:[%s1 + $0x18] sm:$0xf]
    %v34 = vld [vmem:[%s1 + $0x1c] sm:$0xf]
    %v35 = vld [vmem:[%s1 + $0x20] sm:$0xf]
    %v36 = vld [vmem:[%s1 + $0x24] sm:$0xf]
    %v37 = vld [vmem:[%s1 + $0x28] sm:$0xf]
    %v38 = vld [vmem:[%s1 + $0x2c] sm:$0xf]
    %v39 = vld [vmem:[%s1 + $0x30] sm:$0xf]
    %v40 = vld [vmem:[%s1 + $0x34] sm:$0xf]
    %v41 = vld [vmem:[%s1 + $0x38] sm:$0xf]
    %v42 = vld [vmem:[%s1 + $0x3c] sm:$0xf]
    %v43 = vlaneseq
    %v44 = vand.u32 %v43, 127
    %vm45 = vcmp.ge.s32.totalorder %v44, 64
    %vm46 = vcmp.lt.s32.totalorder %v44, 96
    %vm47 = vmand %vm45, %vm46
    %v48 = vsel %vm47, 1.0, 0.5
    %v49 = vsel %vm47, 0.0, 0.5
    %v50 = vld [vmem:[%s2] sm:$0x3]
    %v51 = vld [vmem:[%s3] sm:$0x3]
    %v52 = vld [vmem:[%s0] sm:$0x3]
    %v53 = vpack.c.bf16 %v50, %v50
    %v70 = vunpack.c.l.b16 %v27
    %v71 = vunpack.c.l.b16 %v28
    %v72 = vunpack.c.l.b16 %v29
    %v73 = vunpack.c.l.b16 %v30
    %v74 = vunpack.c.l.b16 %v31
    %v75 = vunpack.c.l.b16 %v32
    %v76 = vunpack.c.l.b16 %v33
    %v77 = vunpack.c.l.b16 %v34
    %v78 = vunpack.c.l.b16 %v35
    %v79 = vunpack.c.l.b16 %v36
    %v80 = vunpack.c.l.b16 %v37
    %v81 = vunpack.c.l.b16 %v38
    %v82 = vunpack.c.l.b16 %v39
    %v83 = vunpack.c.l.b16 %v40
    %v84 = vunpack.c.l.b16 %v41
    %v85 = vunpack.c.l.b16 %v42
    %v86 = vpack.c.b16 %v71, %v70
    %v87 = vpack.c.b16 %v73, %v72
    %v88 = vpack.c.b16 %v75, %v74
    %v89 = vpack.c.b16 %v77, %v76
    %v90 = vpack.c.b16 %v79, %v78
    %v91 = vpack.c.b16 %v81, %v80
    %v92 = vpack.c.b16 %v83, %v82
    %v93 = vpack.c.b16 %v85, %v84
    %102 = vmatpush.bf16.msra.mxu0 %v93
    %103 = vmatpush.bf16.msra.mxu0 %v92
    %104 = vmatpush.bf16.msra.mxu0 %v91
    %105 = vmatpush.bf16.msra.mxu0 %v90
    %106 = vmatpush.bf16.msra.mxu0 %v89
    %107 = vmatpush.bf16.msra.mxu0 %v88
    %108 = vmatpush.bf16.msra.mxu0 %v87
    %109 = vmatpush.bf16.msra.mxu0 %v86
    %110 = vmatmul.bf16.gmra.mxu0 %v53
    %v111 = vpop.f32.mrf.mxu0
    %v112 = vadd.f32 0.0, %v111
    %v113 = vpop.f32.mrf.mxu0
    %114 = vdwg.mxu0
    %v115 = vadd.f32 %v52, %v112
    %v116 = vmul.f32 %v48, %v115
    %v117 = vtanh.pop %v116
    %v118 = vmul.f32 %v48, %v117
    %v119 = vadd.f32 %v118, %v49
    %120 = vrot.lane.b32.xlu0 %v119, 96
    %v121 = vpop.permute.xlu0 %120
    %122 = vrot.lane.b32.xlu0 %v119, 64
    %v123 = vpop.permute.xlu0 %122
    %124 = vrot.lane.b32.xlu0 %v119, 32
    %v125 = vpop.permute.xlu0 %124
    %v126 = vmul.f32 %v121, %v51
    %v127 = vmul.f32 %v119, %v123
    %v128 = vadd.f32 %v126, %v127
    %v129 = vtanh.pop %v128
    %v130 = vmul.f32 %v125, %v129
    %v131 = vld [vmem:[%s0 + $0x2] sm:$0x3]
    %v132 = vpack.c.bf16 %v130, %v130
    %133 = vmatpush.bf16.msra.mxu0 %v93
    %134 = vmatpush.bf16.msra.mxu0 %v92
    %135 = vmatpush.bf16.msra.mxu0 %v91
    %136 = vmatpush.bf16.msra.mxu0 %v90
    %137 = vmatpush.bf16.msra.mxu0 %v89
    %138 = vmatpush.bf16.msra.mxu0 %v88
    %139 = vmatpush.bf16.msra.mxu0 %v87
    %140 = vmatpush.bf16.msra.mxu0 %v86
    %141 = vmatmul.bf16.gmra.mxu0 %v132
    %v142 = vpop.f32.mrf.mxu0
    %v143 = vadd.f32 0.0, %v142
    %v144 = vpop.f32.mrf.mxu0
    %145 = vdwg.mxu0
    %v146 = vadd.f32 %v131, %v143
    %v147 = vmul.f32 %v48, %v146
    %v148 = vtanh.pop %v147
    %v149 = vmul.f32 %v48, %v148
    %v150 = vadd.f32 %v149, %v49
    %151 = vrot.lane.b32.xlu0 %v150, 96
    %v152 = vpop.permute.xlu0 %151
    %153 = vrot.lane.b32.xlu0 %v150, 64
    %v154 = vpop.permute.xlu0 %153
    %155 = vrot.lane.b32.xlu0 %v150, 32
    %v156 = vpop.permute.xlu0 %155
    %v157 = vmul.f32 %v152, %v128
    %v158 = vmul.f32 %v150, %v154
    %v159 = vadd.f32 %v157, %v158
    %v160 = vtanh.pop %v159
    %v161 = vmul.f32 %v156, %v160
    %v162 = vld [vmem:[%s0 + $0x4] sm:$0x3]
    %v163 = vpack.c.bf16 %v161, %v161
    %164 = vmatpush.bf16.msra.mxu0 %v93
    %165 = vmatpush.bf16.msra.mxu0 %v92
    %166 = vmatpush.bf16.msra.mxu0 %v91
    %167 = vmatpush.bf16.msra.mxu0 %v90
    %168 = vmatpush.bf16.msra.mxu0 %v89
    %169 = vmatpush.bf16.msra.mxu0 %v88
    %170 = vmatpush.bf16.msra.mxu0 %v87
    %171 = vmatpush.bf16.msra.mxu0 %v86
    %172 = vmatmul.bf16.gmra.mxu0 %v163
    %v173 = vpop.f32.mrf.mxu0
    %v174 = vadd.f32 0.0, %v173
    %v175 = vpop.f32.mrf.mxu0
    %176 = vdwg.mxu0
    %v177 = vadd.f32 %v162, %v174
    %v178 = vmul.f32 %v48, %v177
    %v179 = vtanh.pop %v178
    %v180 = vmul.f32 %v48, %v179
    %v181 = vadd.f32 %v180, %v49
    %182 = vrot.lane.b32.xlu0 %v181, 96
    %v183 = vpop.permute.xlu0 %182
    %184 = vrot.lane.b32.xlu0 %v181, 64
    %v185 = vpop.permute.xlu0 %184
    %186 = vrot.lane.b32.xlu0 %v181, 32
    %v187 = vpop.permute.xlu0 %186
    %v188 = vmul.f32 %v183, %v159
    %v189 = vmul.f32 %v181, %v185
    %v190 = vadd.f32 %v188, %v189
    %v191 = vtanh.pop %v190
    %v192 = vmul.f32 %v187, %v191
    %v193 = vld [vmem:[%s0 + $0x6] sm:$0x3]
    %v194 = vpack.c.bf16 %v192, %v192
    %195 = vmatpush.bf16.msra.mxu0 %v93
    %196 = vmatpush.bf16.msra.mxu0 %v92
    %197 = vmatpush.bf16.msra.mxu0 %v91
    %198 = vmatpush.bf16.msra.mxu0 %v90
    %199 = vmatpush.bf16.msra.mxu0 %v89
    %200 = vmatpush.bf16.msra.mxu0 %v88
    %201 = vmatpush.bf16.msra.mxu0 %v87
    %202 = vmatpush.bf16.msra.mxu0 %v86
    %203 = vmatmul.bf16.gmra.mxu0 %v194
    %v204 = vpop.f32.mrf.mxu0
    %v205 = vadd.f32 0.0, %v204
    %v206 = vpop.f32.mrf.mxu0
    %207 = vdwg.mxu0
    %v208 = vadd.f32 %v193, %v205
    %v209 = vmul.f32 %v48, %v208
    %v210 = vtanh.pop %v209
    %v211 = vmul.f32 %v48, %v210
    %v212 = vadd.f32 %v211, %v49
    %213 = vrot.lane.b32.xlu0 %v212, 96
    %v214 = vpop.permute.xlu0 %213
    %215 = vrot.lane.b32.xlu0 %v212, 64
    %v216 = vpop.permute.xlu0 %215
    %217 = vrot.lane.b32.xlu0 %v212, 32
    %v218 = vpop.permute.xlu0 %217
    %v219 = vmul.f32 %v214, %v190
    %v220 = vmul.f32 %v212, %v216
    %v221 = vadd.f32 %v219, %v220
    %v222 = vtanh.pop %v221
    %v223 = vmul.f32 %v218, %v222
    %v224 = vld [vmem:[%s0 + $0x8] sm:$0x3]
    %v225 = vpack.c.bf16 %v223, %v223
    %226 = vmatpush.bf16.msra.mxu0 %v93
    %227 = vmatpush.bf16.msra.mxu0 %v92
    %228 = vmatpush.bf16.msra.mxu0 %v91
    %229 = vmatpush.bf16.msra.mxu0 %v90
    %230 = vmatpush.bf16.msra.mxu0 %v89
    %231 = vmatpush.bf16.msra.mxu0 %v88
    %232 = vmatpush.bf16.msra.mxu0 %v87
    %233 = vmatpush.bf16.msra.mxu0 %v86
    %234 = vmatmul.bf16.gmra.mxu0 %v225
    %v235 = vpop.f32.mrf.mxu0
    %v236 = vadd.f32 0.0, %v235
    %v237 = vpop.f32.mrf.mxu0
    %238 = vdwg.mxu0
    %v239 = vadd.f32 %v224, %v236
    %v240 = vmul.f32 %v48, %v239
    %v241 = vtanh.pop %v240
    %v242 = vmul.f32 %v48, %v241
    %v243 = vadd.f32 %v242, %v49
    %244 = vrot.lane.b32.xlu0 %v243, 96
    %v245 = vpop.permute.xlu0 %244
    %246 = vrot.lane.b32.xlu0 %v243, 64
    %v247 = vpop.permute.xlu0 %246
    %248 = vrot.lane.b32.xlu0 %v243, 32
    %v249 = vpop.permute.xlu0 %248
    %v250 = vmul.f32 %v245, %v221
    %v251 = vmul.f32 %v243, %v247
    %v252 = vadd.f32 %v250, %v251
    %v253 = vtanh.pop %v252
    %v254 = vmul.f32 %v249, %v253
    %v255 = vld [vmem:[%s0 + $0xa] sm:$0x3]
    %v256 = vpack.c.bf16 %v254, %v254
    %257 = vmatpush.bf16.msra.mxu0 %v93
    %258 = vmatpush.bf16.msra.mxu0 %v92
    %259 = vmatpush.bf16.msra.mxu0 %v91
    %260 = vmatpush.bf16.msra.mxu0 %v90
    %261 = vmatpush.bf16.msra.mxu0 %v89
    %262 = vmatpush.bf16.msra.mxu0 %v88
    %263 = vmatpush.bf16.msra.mxu0 %v87
    %264 = vmatpush.bf16.msra.mxu0 %v86
    %265 = vmatmul.bf16.gmra.mxu0 %v256
    %v266 = vpop.f32.mrf.mxu0
    %v267 = vadd.f32 0.0, %v266
    %v268 = vpop.f32.mrf.mxu0
    %269 = vdwg.mxu0
    %v270 = vadd.f32 %v255, %v267
    %v271 = vmul.f32 %v48, %v270
    %v272 = vtanh.pop %v271
    %v273 = vmul.f32 %v48, %v272
    %v274 = vadd.f32 %v273, %v49
    %275 = vrot.lane.b32.xlu0 %v274, 96
    %v276 = vpop.permute.xlu0 %275
    %277 = vrot.lane.b32.xlu0 %v274, 64
    %v278 = vpop.permute.xlu0 %277
    %279 = vrot.lane.b32.xlu0 %v274, 32
    %v280 = vpop.permute.xlu0 %279
    %v281 = vmul.f32 %v276, %v252
    %v282 = vmul.f32 %v274, %v278
    %v283 = vadd.f32 %v281, %v282
    %v284 = vtanh.pop %v283
    %v285 = vmul.f32 %v280, %v284
    %v286 = vld [vmem:[%s0 + $0xc] sm:$0x3]
    %v287 = vpack.c.bf16 %v285, %v285
    %288 = vmatpush.bf16.msra.mxu0 %v93
    %289 = vmatpush.bf16.msra.mxu0 %v92
    %290 = vmatpush.bf16.msra.mxu0 %v91
    %291 = vmatpush.bf16.msra.mxu0 %v90
    %292 = vmatpush.bf16.msra.mxu0 %v89
    %293 = vmatpush.bf16.msra.mxu0 %v88
    %294 = vmatpush.bf16.msra.mxu0 %v87
    %295 = vmatpush.bf16.msra.mxu0 %v86
    %296 = vmatmul.bf16.gmra.mxu0 %v287
    %v297 = vpop.f32.mrf.mxu0
    %v298 = vadd.f32 0.0, %v297
    %v299 = vpop.f32.mrf.mxu0
    %300 = vdwg.mxu0
    %v301 = vadd.f32 %v286, %v298
    %v302 = vmul.f32 %v48, %v301
    %v303 = vtanh.pop %v302
    %v304 = vmul.f32 %v48, %v303
    %v305 = vadd.f32 %v304, %v49
    %306 = vrot.lane.b32.xlu0 %v305, 96
    %v307 = vpop.permute.xlu0 %306
    %308 = vrot.lane.b32.xlu0 %v305, 64
    %v309 = vpop.permute.xlu0 %308
    %310 = vrot.lane.b32.xlu0 %v305, 32
    %v311 = vpop.permute.xlu0 %310
    %v312 = vmul.f32 %v307, %v283
    %v313 = vmul.f32 %v305, %v309
    %v314 = vadd.f32 %v312, %v313
    %v315 = vtanh.pop %v314
    %v316 = vmul.f32 %v311, %v315
    %v317 = vld [vmem:[%s0 + $0xe] sm:$0x3]
    %v318 = vpack.c.bf16 %v316, %v316
    %319 = vmatpush.bf16.msra.mxu0 %v93
    %320 = vmatpush.bf16.msra.mxu0 %v92
    %321 = vmatpush.bf16.msra.mxu0 %v91
    %322 = vmatpush.bf16.msra.mxu0 %v90
    %323 = vmatpush.bf16.msra.mxu0 %v89
    %324 = vmatpush.bf16.msra.mxu0 %v88
    %325 = vmatpush.bf16.msra.mxu0 %v87
    %326 = vmatpush.bf16.msra.mxu0 %v86
    %327 = vmatmul.bf16.gmra.mxu0 %v318
    %v328 = vpop.f32.mrf.mxu0
    %v329 = vadd.f32 0.0, %v328
    %v330 = vpop.f32.mrf.mxu0
    %331 = vdwg.mxu0
    %v332 = vadd.f32 %v317, %v329
    %v333 = vmul.f32 %v48, %v332
    %v334 = vtanh.pop %v333
    %v335 = vmul.f32 %v48, %v334
    %v336 = vadd.f32 %v335, %v49
    %337 = vrot.lane.b32.xlu0 %v336, 96
    %v338 = vpop.permute.xlu0 %337
    %339 = vrot.lane.b32.xlu0 %v336, 64
    %v340 = vpop.permute.xlu0 %339
    %341 = vrot.lane.b32.xlu0 %v336, 32
    %v342 = vpop.permute.xlu0 %341
    %v343 = vmul.f32 %v338, %v314
    %v344 = vmul.f32 %v336, %v340
    %v345 = vadd.f32 %v343, %v344
    %v346 = vtanh.pop %v345
    %v347 = vmul.f32 %v342, %v346
    %348 = vst [vmem:[%s7] sm:$0x3] %v347
    %349 = vst [vmem:[%s8] sm:$0x3] %v345
    %v350 = vld [vmem:[%s4] sm:$0xff]
    %v351 = vld [vmem:[%s4 + $0x8] sm:$0xff]
    %v352 = vld [vmem:[%s4 + $0x10] sm:$0xff]
    %v353 = vld [vmem:[%s4 + $0x18] sm:$0xff]
    %v354 = vld [vmem:[%s4 + $0x20] sm:$0xff]
    %v355 = vld [vmem:[%s4 + $0x28] sm:$0xff]
    %v356 = vld [vmem:[%s4 + $0x30] sm:$0xff]
    %v357 = vld [vmem:[%s4 + $0x38] sm:$0xff]
    %v358 = vld [vmem:[%s4 + $0x40] sm:$0xff]
    %v359 = vld [vmem:[%s4 + $0x48] sm:$0xff]
    %v360 = vld [vmem:[%s4 + $0x50] sm:$0xff]
    %v361 = vld [vmem:[%s4 + $0x58] sm:$0xff]
    %v362 = vld [vmem:[%s4 + $0x60] sm:$0xff]
    %v363 = vld [vmem:[%s4 + $0x68] sm:$0xff]
    %v364 = vld [vmem:[%s4 + $0x70] sm:$0xff]
    %v365 = vld [vmem:[%s4 + $0x78] sm:$0xff]
    %v366 = vld [vmem:[%s5] sm:$0x1]
    %v368 = vperm.slane %v366, 0
    %370 = vmatpush.msra.mxu0 %v365
    %371 = vmatpush.msra.mxu0 %v364
    %372 = vmatpush.msra.mxu0 %v363
    %373 = vmatpush.msra.mxu0 %v362
    %374 = vmatpush.msra.mxu0 %v361
    %375 = vmatpush.msra.mxu0 %v360
    %376 = vmatpush.msra.mxu0 %v359
    %377 = vmatpush.msra.mxu0 %v358
    %378 = vmatpush.msra.mxu0 %v357
    %379 = vmatpush.msra.mxu0 %v356
    %380 = vmatpush.msra.mxu0 %v355
    %381 = vmatpush.msra.mxu0 %v354
    %382 = vmatpush.msra.mxu0 %v353
    %383 = vmatpush.msra.mxu0 %v352
    %384 = vmatpush.msra.mxu0 %v351
    %385 = vmatpush.msra.mxu0 %v350
    %386 = vmatmul.f32.gmra.mxu0 %v347
    %v387 = vpop.f32.mrf.mxu0
    %v388 = vadd.f32 %v368, %v387
    %389 = vdwg.mxu0
    %vm390 = vcmask 1041408
    %v391 = vsel %vm390, %v388, -inf
    %392 = vmax.xlane.f32.xlu0 %v391
    %v393 = vpop.xlane.xlu0 %392
    %v394 = vsub.f32 %v388, %v393
    %v395 = vmul.f32 %v394, 1.442695
    %v396 = vpow.pop %v395
    %v397 = vsel %vm390, %v396, 0.0
    %398 = vadd.xlane.f32.xlu0 %v397
    %v399 = vpop.xlane.xlu0 %398
    %v400 = vlog2.pop %v399
    %v401 = vmul.f32 %v400, 0.6931472
    %v402 = vsub.f32 %v394, %v401
    %403 = vst [vmem:[#allocation2] sm:$0x3] %v402
    // Predicated region
    $region26: #{trade_ai_forward.1} parent=1 // pred_check
      _
    $region27: #{trade_ai_forward.1} parent=1 // pred_check_branch
      %405 = sbr.rel (0) target = $region29
    $region28: #{trade_ai_forward.1} parent=1 // pred_region
      %407 = vsyncadd [#allocation3], 0
      %s409 = sshll.u32 [#allocation2], 4
      %s410 = int_to_ptr.vmem [resolvable:$true] %s409
      %s411 = sshll.u32 %s6, 4
      %s412 = int_to_ptr.hbm [resolvable:$true] %s411
      %414 = dma.vmem_to_hbm [thread:$0]  %s410, 32, %s412, [#allocation3]
    $region29: #{trade_ai_forward.1} parent=1 // pred_fallthru
      _
    // Predicated region
    $region30: #{trade_ai_forward.1} parent=1 // pred_check
      _
    $region31: #{trade_ai_forward.1} parent=1 // pred_check_branch
      %416 = sbr.rel (0) target = $region33
    $region32: #{trade_ai_forward.1} parent=1 // pred_region
      _
    $region33: #{trade_ai_forward.1} parent=1 // pred_fallthru
      _
    // Predicated region
    $region34: #{trade_ai_forward.1} parent=1 // pred_check
      _
    $region35: #{trade_ai_forward.1} parent=1 // pred_check_branch
      %418 = sbr.rel (0) target = $region37
    $region36: #{trade_ai_forward.1} parent=1 // pred_region
      _
    $region37: #{trade_ai_forward.1} parent=1 // pred_fallthru
      _
    // Predicated region
    $region38: #{trade_ai_forward.1} parent=1 // pred_check
      _
    $region39: #{trade_ai_forward.1} parent=1 // pred_check_branch
      %420 = sbr.rel (0) target = $region41
    $region40: #{trade_ai_forward.1} parent=1 // pred_region
      %422 = dma.done [#allocation3], 32
    $region41: #{trade_ai_forward.1} parent=1 // pred_fallthru
      _
    // Predicated region
    $region42: #{trade_ai_forward.1} parent=1 // pred_check
      _
    $region43: #{trade_ai_forward.1} parent=1 // pred_check_branch
      %424 = sbr.rel (0) target = $region45
    $region44: #{trade_ai_forward.1} parent=1 // pred_region
      _
    $region45: #{trade_ai_forward.1} parent=1 // pred_fallthru
      _
    // Predicated region
    $region46: #{trade_ai_forward.1} parent=1 // pred_check
      _
    $region47: #{trade_ai_forward.1} parent=1 // pred_check_branch
      %426 = sbr.rel (0) target = $region49
    $region48: #{trade_ai_forward.1} parent=1 // pred_region
      _
    $region49: #{trade_ai_forward.1} parent=1 // pred_fallthru
      _
    %427 = vsyncpa [#allocation3], 1

</llo_original>
